<compile_context>
chip_gen: v7x
topology: tpu7x:2x2x1
jax: 0.10.0
libtpu: 0.0.40
codegen_flags: <defaults>
</compile_context>

<pallas_src>
import functools

import jax
import jax.numpy as jnp
from jax.experimental import pallas as pl
from jax.experimental.pallas import tpu as pltpu


def _leaky(x, slope):
    # slope in (0, 1): max(x, slope*x) == LeakyReLU(x, slope).
    return jnp.maximum(x, slope * x)


def matclass_kernel(x_ref,
                    w0_ref, b0_ref,
                    w1_ref, b1_ref,
                    w2_ref, b2_ref,
                    w3_ref, b3_ref,
                    w4_ref, b4_ref,
                    o_ref):
    # layer1: 3x3 valid conv on 3x3 input == (TM,9)@(9,64); BN folded into w0/b0.
    x = x_ref[...].astype(jnp.bfloat16)                  # in-kernel cast (f32 in HBM)
    h = jnp.dot(x, w0_ref[...], preferred_element_type=jnp.float32) + b0_ref[...]
    h = _leaky(h, 0.01).astype(jnp.bfloat16)

    # fc1: Linear(64,128) [+folded BN] + LeakyReLU(0.2)
    h = jnp.dot(h, w1_ref[...], preferred_element_type=jnp.float32) + b1_ref[...]
    h = _leaky(h, 0.2).astype(jnp.bfloat16)

    # fc2: Linear(128,256) [+folded BN] + LeakyReLU(0.2)   (Dropout(0.3) identity, eval)
    h = jnp.dot(h, w2_ref[...], preferred_element_type=jnp.float32) + b2_ref[...]
    h = _leaky(h, 0.2).astype(jnp.bfloat16)

    # fc3: Linear(256,512) [+folded BN] + LeakyReLU(0.01)  (Dropout(0.2) identity, eval)
    # Keep the largest intermediate bf16 to halve its store/spill traffic.
    h = jnp.dot(h, w3_ref[...], preferred_element_type=jnp.float32) + b3_ref[...]
    h = _leaky(h, 0.01).astype(jnp.bfloat16)

    # fc4: Linear(512,1) + Sigmoid.  bf16 VPU multiply + f32 XLU row-reduce so the
    # MXU never sees a 1-column matmul; exact sigmoid keeps the output in [0, 1].
    prod = (h * w4_ref[...]).astype(jnp.float32)
    z = jnp.sum(prod, axis=-1, keepdims=True) + b4_ref[...]
    o_ref[...] = 1.0 / (1.0 + jnp.exp(-z))
    # TODO(synk): Dropout layers are identity (eval mode); training-mode dropout and
    # batch-statistics BatchNorm are not reproduced.


def _round_up(x, m):
    return ((x + m - 1) // m) * m


def _cdiv(a, b):
    return -(-a // b)


def _choose_tile(n, tm_max):
    """Pick (tm, grid, n_pad): grid-count first so padding is bounded per step."""
    g = _cdiv(n, tm_max)
    # v7x megacore: with a single "parallel" axis, grid=(1,) leaves one TC idle.
    if g == 1 and n > 256:
        g = 2
    quantum = 256 if n >= 256 else 8          # MXU-friendly, or sublane for tiny N
    tm = _round_up(_cdiv(n, g), quantum)
    grid = _cdiv(n, tm)
    n_pad = grid * tm
    return tm, grid, n_pad


@functools.partial(jax.jit, static_argnames=("tm_max",))
def matclassification_net(x_nchw, params, tm_max=2048):
    """x_nchw: (N, 1, 3, 3) float32.  Returns (N, 1) sigmoid scores (float32)."""
    assert tm_max % 256 == 0
    n = x_nchw.shape[0]
    x_flat = x_nchw.reshape(n, -1)                       # (N, 9) f32; cast in-kernel

    tm, grid, n_pad = _choose_tile(n, tm_max)
    if n_pad != n:
        x_flat = jnp.pad(x_flat, ((0, n_pad - n), (0, 0)))

    # Weights/biases: full-array blocks, constant index_map -> VMEM-resident, no re-DMA.
    def resident(arr):
        nd = arr.ndim
        return pl.BlockSpec(arr.shape, lambda i, _nd=nd: (0,) * _nd)

    in_specs = [pl.BlockSpec((tm, 9), lambda i: (i, 0))] + [resident(p) for p in params]
    out_specs = pl.BlockSpec((tm, 1), lambda i: (i, 0))

    macs = 9 * 64 + 64 * 128 + 128 * 256 + 256 * 512 + 512 * 1
    weight_bytes = 2 * macs + 4 * (64 + 128 + 256 + 512 + 1)
    cost = pl.CostEstimate(
        flops=2 * n_pad * macs,
        transcendentals=n_pad,                            # one exp per row
        bytes_accessed=n_pad * (9 * 4 + 1 * 4) + weight_bytes,
    )

    out = pl.pallas_call(
        matclass_kernel,
        out_shape=jax.ShapeDtypeStruct((n_pad, 1), jnp.float32),
        grid=(grid,),
        in_specs=in_specs,
        out_specs=out_specs,
        compiler_params=pltpu.CompilerParams(
            dimension_semantics=("parallel",),
            vmem_limit_bytes=32 * 1024 * 1024,            # portable across v5e/v6e/v7x
        ),
        cost_estimate=cost,
    )(x_flat, *params)
    return out[:n]


def _linear_init(key, fan_in, fan_out):
    """PyTorch default Linear/Conv init: U(-1/sqrt(fan_in), 1/sqrt(fan_in))."""
    kw, kb = jax.random.split(key)
    bound = 1.0 / (fan_in ** 0.5)
    w = jax.random.uniform(kw, (fan_in, fan_out), jnp.float32, -bound, bound)
    b = jax.random.uniform(kb, (1, fan_out), jnp.float32, -bound, bound)
    return w, b


def _fold_linear_bn(key, fan_in, fan_out, eps=1e-5):
    """Linear + eval-mode BatchNorm folded: W' = W*scale (per out col), b' = b*scale + shift.

    Fresh PyTorch BN (eval): gamma=1, beta=0, running_mean=0, running_var=1.
    Weights returned bf16 (MXU operand), bias f32 (VPU epilogue).
    """
    w, b = _linear_init(key, fan_in, fan_out)
    gamma = jnp.ones((fan_out,), jnp.float32)
    beta = jnp.zeros((fan_out,), jnp.float32)
    mean = jnp.zeros((fan_out,), jnp.float32)
    var = jnp.ones((fan_out,), jnp.float32)
    scale = gamma * jax.lax.rsqrt(var + eps)
    shift = beta - mean * scale
    w_f = (w * scale[None, :]).astype(jnp.bfloat16)
    b_f = (b * scale[None, :] + shift[None, :]).astype(jnp.float32)
    return w_f, b_f


def init_params(key):
    k0, k1, k2, k3, k4 = jax.random.split(key, 5)
    # layer1 conv: weight (64,1,3,3) flattened to (9,64) + BN2d(64) folded.
    w0, b0 = _fold_linear_bn(k0, 9, 64)
    w1, b1 = _fold_linear_bn(k1, 64, 128)
    w2, b2 = _fold_linear_bn(k2, 128, 256)
    w3, b3 = _fold_linear_bn(k3, 256, 512)
    # fc4: Linear(512, num_classes=1), no BN.  Stored as a bf16 row (1,512) for the
    # VPU-multiply + reduce head, plus (1,1) f32 bias.
    w4, b4 = _linear_init(k4, 512, 1)
    w4_row = w4.T.astype(jnp.bfloat16)           # (1, 512)
    b4 = b4.astype(jnp.float32)                  # (1, 1)
    return (w0, b0, w1, b1, w2, b2, w3, b3, w4_row, b4)


if __name__ == "__main__":
    key = jax.random.PRNGKey(0)
    kx, kp = jax.random.split(key)
    # Input must be (N, 1, 3, 3) so flatten(layer1(x)) has 64 features for fc1.
    x = jax.random.normal(kx, (8, 1, 3, 3), dtype=jnp.float32)
    params = init_params(kp)

    out = matclassification_net(x, params)
    out = jax.block_until_ready(out)
    assert out.shape == (8, 1) and bool(jnp.all(jnp.isfinite(out)))
    assert bool(jnp.all((out >= 0.0) & (out <= 1.0)))
    print("KERNEL_OK")
</pallas_src>

<mosaic_0001>
module attributes {stable_mosaic.version = 11 : i64} {
  func.func @matclass_kernel(%arg0: i32, %arg1: memref<8x9xf32, #tpu.memory_space<vmem>>, %arg2: memref<9x64xbf16, #tpu.memory_space<vmem>>, %arg3: memref<1x64xf32, #tpu.memory_space<vmem>>, %arg4: memref<64x128xbf16, #tpu.memory_space<vmem>>, %arg5: memref<1x128xf32, #tpu.memory_space<vmem>>, %arg6: memref<128x256xbf16, #tpu.memory_space<vmem>>, %arg7: memref<1x256xf32, #tpu.memory_space<vmem>>, %arg8: memref<256x512xbf16, #tpu.memory_space<vmem>>, %arg9: memref<1x512xf32, #tpu.memory_space<vmem>>, %arg10: memref<1x512xbf16, #tpu.memory_space<vmem>>, %arg11: memref<1x1xf32, #tpu.memory_space<vmem>>, %arg12: memref<8x1xf32, #tpu.memory_space<vmem>>) attributes {dimension_semantics = [#tpu.dimension_semantics<parallel>], iteration_bounds = array<i64: 1>, scalar_prefetch = 0 : i64, scratch_operands = 0 : i64, tpu.core_type = #tpu.core_type<tc>, window_params = [{transform_indices = @transform_0, window_bounds = array<i64: 8, 9>}, {pipeline_mode = #tpu.pipeline_mode<synchronous>, transform_indices = @transform_1, window_bounds = array<i64: 9, 64>}, {pipeline_mode = #tpu.pipeline_mode<synchronous>, transform_indices = @transform_2, window_bounds = array<i64: 1, 64>}, {pipeline_mode = #tpu.pipeline_mode<synchronous>, transform_indices = @transform_3, window_bounds = array<i64: 64, 128>}, {pipeline_mode = #tpu.pipeline_mode<synchronous>, transform_indices = @transform_4, window_bounds = array<i64: 1, 128>}, {pipeline_mode = #tpu.pipeline_mode<synchronous>, transform_indices = @transform_5, window_bounds = array<i64: 128, 256>}, {pipeline_mode = #tpu.pipeline_mode<synchronous>, transform_indices = @transform_6, window_bounds = array<i64: 1, 256>}, {pipeline_mode = #tpu.pipeline_mode<synchronous>, transform_indices = @transform_7, window_bounds = array<i64: 256, 512>}, {pipeline_mode = #tpu.pipeline_mode<synchronous>, transform_indices = @transform_8, window_bounds = array<i64: 1, 512>}, {pipeline_mode = #tpu.pipeline_mode<synchronous>, transform_indices = @transform_9, window_bounds = array<i64: 1, 512>}, {pipeline_mode = #tpu.pipeline_mode<synchronous>, transform_indices = @transform_10, window_bounds = array<i64: 1, 1>}, {transform_indices = @transform_11, window_bounds = array<i64: 8, 1>}]} {
    %c0 = arith.constant 0 : index
    %c0_0 = arith.constant 0 : index
    %0 = vector.load %arg1[%c0, %c0_0] : memref<8x9xf32, #tpu.memory_space<vmem>>, vector<8x9xf32>
    %1 = arith.truncf %0 : vector<8x9xf32> to vector<8x9xbf16>
    %c0_1 = arith.constant 0 : index
    %c0_2 = arith.constant 0 : index
    %2 = vector.load %arg2[%c0_1, %c0_2] : memref<9x64xbf16, #tpu.memory_space<vmem>>, vector<9x64xbf16>
    %cst = arith.constant dense<0.000000e+00> : vector<8x64xf32>
    %3 = tpu.matmul %1, %2, %cst {dimension_numbers = #tpu.dot_dimension_numbers<[1], [0], [0], [1], [0, 0, 1, 1], [], []>} : vector<8x9xbf16>, vector<9x64xbf16>, vector<8x64xf32> -> vector<8x64xf32>
    %c0_3 = arith.constant 0 : index
    %c0_4 = arith.constant 0 : index
    %4 = vector.load %arg3[%c0_3, %c0_4] : memref<1x64xf32, #tpu.memory_space<vmem>>, vector<1x64xf32>
    %5 = vector.broadcast %4 : vector<1x64xf32> to vector<8x64xf32>
    %6 = arith.addf %3, %5 : vector<8x64xf32>
    %cst_5 = arith.constant 0.00999999977 : f32
    %7 = vector.broadcast %cst_5 : f32 to vector<8x64xf32>
    %8 = arith.mulf %7, %6 : vector<8x64xf32>
    %9 = arith.maximumf %6, %8 : vector<8x64xf32>
    %10 = arith.truncf %9 : vector<8x64xf32> to vector<8x64xbf16>
    %c0_6 = arith.constant 0 : index
    %c0_7 = arith.constant 0 : index
    %11 = vector.load %arg4[%c0_6, %c0_7] : memref<64x128xbf16, #tpu.memory_space<vmem>>, vector<64x128xbf16>
    %cst_8 = arith.constant dense<0.000000e+00> : vector<8x128xf32>
    %12 = tpu.matmul %10, %11, %cst_8 {dimension_numbers = #tpu.dot_dimension_numbers<[1], [0], [0], [1], [0, 0, 1, 1], [], []>} : vector<8x64xbf16>, vector<64x128xbf16>, vector<8x128xf32> -> vector<8x128xf32>
    %c0_9 = arith.constant 0 : index
    %c0_10 = arith.constant 0 : index
    %13 = vector.load %arg5[%c0_9, %c0_10] : memref<1x128xf32, #tpu.memory_space<vmem>>, vector<1x128xf32>
    %14 = vector.broadcast %13 : vector<1x128xf32> to vector<8x128xf32>
    %15 = arith.addf %12, %14 : vector<8x128xf32>
    %cst_11 = arith.constant 2.000000e-01 : f32
    %16 = vector.broadcast %cst_11 : f32 to vector<8x128xf32>
    %17 = arith.mulf %16, %15 : vector<8x128xf32>
    %18 = arith.maximumf %15, %17 : vector<8x128xf32>
    %19 = arith.truncf %18 : vector<8x128xf32> to vector<8x128xbf16>
    %c0_12 = arith.constant 0 : index
    %c0_13 = arith.constant 0 : index
    %20 = vector.load %arg6[%c0_12, %c0_13] : memref<128x256xbf16, #tpu.memory_space<vmem>>, vector<128x256xbf16>
    %cst_14 = arith.constant dense<0.000000e+00> : vector<8x256xf32>
    %21 = tpu.matmul %19, %20, %cst_14 {dimension_numbers = #tpu.dot_dimension_numbers<[1], [0], [0], [1], [0, 0, 1, 1], [], []>} : vector<8x128xbf16>, vector<128x256xbf16>, vector<8x256xf32> -> vector<8x256xf32>
    %c0_15 = arith.constant 0 : index
    %c0_16 = arith.constant 0 : index
    %22 = vector.load %arg7[%c0_15, %c0_16] : memref<1x256xf32, #tpu.memory_space<vmem>>, vector<1x256xf32>
    %23 = vector.broadcast %22 : vector<1x256xf32> to vector<8x256xf32>
    %24 = arith.addf %21, %23 : vector<8x256xf32>
    %cst_17 = arith.constant 2.000000e-01 : f32
    %25 = vector.broadcast %cst_17 : f32 to vector<8x256xf32>
    %26 = arith.mulf %25, %24 : vector<8x256xf32>
    %27 = arith.maximumf %24, %26 : vector<8x256xf32>
    %28 = arith.truncf %27 : vector<8x256xf32> to vector<8x256xbf16>
    %c0_18 = arith.constant 0 : index
    %c0_19 = arith.constant 0 : index
    %29 = vector.load %arg8[%c0_18, %c0_19] : memref<256x512xbf16, #tpu.memory_space<vmem>>, vector<256x512xbf16>
    %cst_20 = arith.constant dense<0.000000e+00> : vector<8x512xf32>
    %30 = tpu.matmul %28, %29, %cst_20 {dimension_numbers = #tpu.dot_dimension_numbers<[1], [0], [0], [1], [0, 0, 1, 1], [], []>} : vector<8x256xbf16>, vector<256x512xbf16>, vector<8x512xf32> -> vector<8x512xf32>
    %c0_21 = arith.constant 0 : index
    %c0_22 = arith.constant 0 : index
    %31 = vector.load %arg9[%c0_21, %c0_22] : memref<1x512xf32, #tpu.memory_space<vmem>>, vector<1x512xf32>
    %32 = vector.broadcast %31 : vector<1x512xf32> to vector<8x512xf32>
    %33 = arith.addf %30, %32 : vector<8x512xf32>
    %cst_23 = arith.constant 0.00999999977 : f32
    %34 = vector.broadcast %cst_23 : f32 to vector<8x512xf32>
    %35 = arith.mulf %34, %33 : vector<8x512xf32>
    %36 = arith.maximumf %33, %35 : vector<8x512xf32>
    %37 = arith.truncf %36 : vector<8x512xf32> to vector<8x512xbf16>
    %c0_24 = arith.constant 0 : index
    %c0_25 = arith.constant 0 : index
    %38 = vector.load %arg10[%c0_24, %c0_25] : memref<1x512xbf16, #tpu.memory_space<vmem>>, vector<1x512xbf16>
    %39 = vector.broadcast %38 : vector<1x512xbf16> to vector<8x512xbf16>
    %40 = arith.mulf %37, %39 : vector<8x512xbf16>
    %41 = arith.extf %40 : vector<8x512xbf16> to vector<8x512xf32>
    %cst_26 = arith.constant dense<0.000000e+00> : vector<8xf32>
    %42 = vector.multi_reduction <add>, %41, %cst_26 [1] : vector<8x512xf32> to vector<8xf32>
    %43 = vector.shape_cast %42 : vector<8xf32> to vector<8x1xf32>
    %c0_27 = arith.constant 0 : index
    %c0_28 = arith.constant 0 : index
    %44 = vector.load %arg11[%c0_27, %c0_28] : memref<1x1xf32, #tpu.memory_space<vmem>>, vector<1x1xf32>
    %45 = vector.broadcast %44 : vector<1x1xf32> to vector<8x1xf32>
    %46 = arith.addf %43, %45 : vector<8x1xf32>
    %cst_29 = arith.constant 0.000000e+00 : f32
    %47 = vector.broadcast %cst_29 : f32 to vector<8x1xf32>
    %48 = arith.subf %47, %46 : vector<8x1xf32>
    %49 = math.exp %48 : vector<8x1xf32>
    %cst_30 = arith.constant 1.000000e+00 : f32
    %50 = vector.broadcast %cst_30 : f32 to vector<8x1xf32>
    %51 = arith.addf %50, %49 : vector<8x1xf32>
    %cst_31 = arith.constant 1.000000e+00 : f32
    %52 = vector.broadcast %cst_31 : f32 to vector<8x1xf32>
    %53 = arith.divf %52, %51 : vector<8x1xf32>
    %c0_32 = arith.constant 0 : index
    %c0_33 = arith.constant 0 : index
    %54 = vector.load %arg12[%c0_32, %c0_33] : memref<8x1xf32, #tpu.memory_space<vmem>>, vector<8x1xf32>
    tpu.vector_store %arg12[%c0_32, %c0_33], %53 {strides = array<i32>} : memref<8x1xf32, #tpu.memory_space<vmem>>, vector<8x1xf32>,
    return
  }
  func.func @transform_0(%arg0: i32) -> (i32, i32) {
    %c0_i32 = arith.constant 0 : i32
    %c0_i32_0 = arith.constant 0 : i32
    return %arg0, %c0_i32 : i32, i32
  }
  func.func @transform_1(%arg0: i32) -> (i32, i32) {
    %c0_i32 = arith.constant 0 : i32
    %c0_i32_0 = arith.constant 0 : i32
    %c0_i32_1 = arith.constant 0 : i32
    return %c0_i32, %c0_i32_0 : i32, i32
  }
  func.func @transform_2(%arg0: i32) -> (i32, i32) {
    %c0_i32 = arith.constant 0 : i32
    %c0_i32_0 = arith.constant 0 : i32
    %c0_i32_1 = arith.constant 0 : i32
    return %c0_i32, %c0_i32_0 : i32, i32
  }
  func.func @transform_3(%arg0: i32) -> (i32, i32) {
    %c0_i32 = arith.constant 0 : i32
    %c0_i32_0 = arith.constant 0 : i32
    %c0_i32_1 = arith.constant 0 : i32
    return %c0_i32, %c0_i32_0 : i32, i32
  }
  func.func @transform_4(%arg0: i32) -> (i32, i32) {
    %c0_i32 = arith.constant 0 : i32
    %c0_i32_0 = arith.constant 0 : i32
    %c0_i32_1 = arith.constant 0 : i32
    return %c0_i32, %c0_i32_0 : i32, i32
  }
  func.func @transform_5(%arg0: i32) -> (i32, i32) {
    %c0_i32 = arith.constant 0 : i32
    %c0_i32_0 = arith.constant 0 : i32
    %c0_i32_1 = arith.constant 0 : i32
    return %c0_i32, %c0_i32_0 : i32, i32
  }
  func.func @transform_6(%arg0: i32) -> (i32, i32) {
    %c0_i32 = arith.constant 0 : i32
    %c0_i32_0 = arith.constant 0 : i32
    %c0_i32_1 = arith.constant 0 : i32
    return %c0_i32, %c0_i32_0 : i32, i32
  }
  func.func @transform_7(%arg0: i32) -> (i32, i32) {
    %c0_i32 = arith.constant 0 : i32
    %c0_i32_0 = arith.constant 0 : i32
    %c0_i32_1 = arith.constant 0 : i32
    return %c0_i32, %c0_i32_0 : i32, i32
  }
  func.func @transform_8(%arg0: i32) -> (i32, i32) {
    %c0_i32 = arith.constant 0 : i32
    %c0_i32_0 = arith.constant 0 : i32
    %c0_i32_1 = arith.constant 0 : i32
    return %c0_i32, %c0_i32_0 : i32, i32
  }
  func.func @transform_9(%arg0: i32) -> (i32, i32) {
    %c0_i32 = arith.constant 0 : i32
    %c0_i32_0 = arith.constant 0 : i32
    %c0_i32_1 = arith.constant 0 : i32
    return %c0_i32, %c0_i32_0 : i32, i32
  }
  func.func @transform_10(%arg0: i32) -> (i32, i32) {
    %c0_i32 = arith.constant 0 : i32
    %c0_i32_0 = arith.constant 0 : i32
    %c0_i32_1 = arith.constant 0 : i32
    return %c0_i32, %c0_i32_0 : i32, i32
  }
  func.func @transform_11(%arg0: i32) -> (i32, i32) {
    %c0_i32 = arith.constant 0 : i32
    %c0_i32_0 = arith.constant 0 : i32
    return %arg0, %c0_i32 : i32, i32
  }
}

</mosaic_0001>

<llo_original>
// kernel: matclassification_net.1
$region0: #{matclassification_net.1}
  #allocation0 [shape = 'u32[]', space=smem, size = 0x4, offset = 0x4, fixed_abs, tag = 'smem constant byte address 0x4 - core index']
  #allocation1 [shape = 'u32[144,128]{1,0:T(1,128)}', space=vmem, size = 0x12000, scoped, tag = 'internal scratch']
  #allocation2 [shape = 'f32[1,1]{1,0:T(1,128)S(1)}', space=vmem, size = 0x200, scoped, tag = 'scoped memory for matclassification_net.1']
  %s0 = inlined_call_operand.vmem [shape: f32[8,9], index: 0, kind: input, shape index: {}]
  %s1 = inlined_call_operand.vmem [shape: bf16[9,64], index: 1, kind: input, shape index: {}]
  %s2 = inlined_call_operand.vmem [shape: f32[1,64], index: 2, kind: input, shape index: {}]
  %s3 = inlined_call_operand.vmem [shape: bf16[64,128], index: 3, kind: input, shape index: {}]
  %s4 = inlined_call_operand.vmem [shape: f32[1,128], index: 4, kind: input, shape index: {}]
  %s5 = inlined_call_operand.hbm [shape: bf16[128,256], index: 5, kind: input, shape index: {}]
  %s6 = inlined_call_operand.vmem [shape: f32[1,256], index: 6, kind: input, shape index: {}]
  %s7 = inlined_call_operand.hbm [shape: bf16[256,512], index: 7, kind: input, shape index: {}]
  %s8 = inlined_call_operand.vmem [shape: f32[1,512], index: 8, kind: input, shape index: {}]
  %s9 = inlined_call_operand.vmem [shape: bf16[1,512], index: 9, kind: input, shape index: {}]
  %s10 = inlined_call_operand.<no memory space> [shape: f32[1,1], index: 10, kind: input, shape index: {}]
  %s11 = inlined_call_operand.vmem [shape: f32[8,1], index: 11, kind: output, shape index: {}]
  %s12 = sld [smem:[#allocation0]]
  $region62: #{matclassification_net.1} parent=0
    _
  %s14 = ssub.s32 1, %s12
  %s15 = scalar_select 0, %s14, %s12
  %v16 = vstv %s10
  %17 = vst [vmem:[#allocation2] sm:$0x1] %v16
  $region1: #{matclassification_net.1} parent=0
    #allocation3 [shape = 'u8[65536]{0}', space=vmem, size = 0x10000, scoped, tag = 'input window, operand 5, single buffered']
    #allocation4 [shape = 's32[1]{0}', space=sflag, size = 0x4, scoped, tag = 'scoped memory for matclassification_net.1']
    #allocation5 [shape = 'u8[262144]{0}', space=vmem, size = 0x40000, scoped, tag = 'input window, operand 7, single buffered']
    #allocation6 [shape = 's32[1]{0}', space=sflag, size = 0x4, scoped, tag = 'scoped memory for matclassification_net.1']
    %18 = vsyncpa [#allocation4], 0
    %19 = vsyncpa [#allocation6], 0
    // Predicated region
    $region2: #{matclassification_net.1} parent=1 // pred_check
      _
    $region3: #{matclassification_net.1} parent=1 // pred_check_branch
      %21 = sbr.rel (0) target = $region5
    $region4: #{matclassification_net.1} parent=1 // pred_region
      _
    $region5: #{matclassification_net.1} parent=1 // pred_fallthru
      _
    // Predicated region
    $region6: #{matclassification_net.1} parent=1 // pred_check
      _
    $region7: #{matclassification_net.1} parent=1 // pred_check_branch
      %23 = sbr.rel (0) target = $region9
    $region8: #{matclassification_net.1} parent=1 // pred_region
      _
    $region9: #{matclassification_net.1} parent=1 // pred_fallthru
      _
    // Predicated region
    $region10: #{matclassification_net.1} parent=1 // pred_check
      _
    $region11: #{matclassification_net.1} parent=1 // pred_check_branch
      %25 = sbr.rel (0) target = $region13
    $region12: #{matclassification_net.1} parent=1 // pred_region
      _
    $region13: #{matclassification_net.1} parent=1 // pred_fallthru
      _
    // Predicated region
    $region14: #{matclassification_net.1} parent=1 // pred_check
      _
    $region15: #{matclassification_net.1} parent=1 // pred_check_branch
      %27 = sbr.rel (0) target = $region17
    $region16: #{matclassification_net.1} parent=1 // pred_region
      _
    $region17: #{matclassification_net.1} parent=1 // pred_fallthru
      _
    // Predicated region
    $region18: #{matclassification_net.1} parent=1 // pred_check
      _
    $region19: #{matclassification_net.1} parent=1 // pred_check_branch
      %29 = sbr.rel (0) target = $region21
    $region20: #{matclassification_net.1} parent=1 // pred_region
      _
    $region21: #{matclassification_net.1} parent=1 // pred_fallthru
      _
    // Predicated region
    $region22: #{matclassification_net.1} parent=1 // pred_check
      _
    $region23: #{matclassification_net.1} parent=1 // pred_check_branch
      %31 = sbr.rel (0) target = $region25
    $region24: #{matclassification_net.1} parent=1 // pred_region
      %s33 = ssub.s32 2048, 2048
      %34 = vsyncadd [#allocation4], %s33
      %s35 = sshll.u32 [#allocation3], 4
      %s36 = int_to_ptr.vmem [resolvable:$true] %s35
      %41 = dma.hbm_to_vmem [thread:$0]  %s5, 2048, %s36, [#allocation4], 128, 128, 8
    $region25: #{matclassification_net.1} parent=1 // pred_fallthru
      _
    // Predicated region
    $region26: #{matclassification_net.1} parent=1 // pred_check
      _
    $region27: #{matclassification_net.1} parent=1 // pred_check_branch
      %43 = sbr.rel (0) target = $region29
    $region28: #{matclassification_net.1} parent=1 // pred_region
      _
    $region29: #{matclassification_net.1} parent=1 // pred_fallthru
      _
    // Predicated region
    $region30: #{matclassification_net.1} parent=1 // pred_check
      _
    $region31: #{matclassification_net.1} parent=1 // pred_check_branch
      %45 = sbr.rel (0) target = $region33
    $region32: #{matclassification_net.1} parent=1 // pred_region
      %s47 = ssub.s32 8192, 8192
      %48 = vsyncadd [#allocation6], %s47
      %s49 = sshll.u32 [#allocation5], 4
      %s50 = int_to_ptr.vmem [resolvable:$true] %s49
      %55 = dma.hbm_to_vmem [thread:$0]  %s7, 8192, %s50, [#allocation6], 256, 256, 16
    $region33: #{matclassification_net.1} parent=1 // pred_fallthru
      _
    // Predicated region
    $region34: #{matclassification_net.1} parent=1 // pred_check
      _
    $region35: #{matclassification_net.1} parent=1 // pred_check_branch
      %57 = sbr.rel (0) target = $region37
    $region36: #{matclassification_net.1} parent=1 // pred_region
      _
    $region37: #{matclassification_net.1} parent=1 // pred_fallthru
      _
    // Predicated region
    $region38: #{matclassification_net.1} parent=1 // pred_check
      _
    $region39: #{matclassification_net.1} parent=1 // pred_check_branch
      %59 = sbr.rel (0) target = $region41
    $region40: #{matclassification_net.1} parent=1 // pred_region
      _
    $region41: #{matclassification_net.1} parent=1 // pred_fallthru
      _
    // Predicated region
    $region42: #{matclassification_net.1} parent=1 // pred_check
      _
    $region43: #{matclassification_net.1} parent=1 // pred_check_branch
      %61 = sbr.rel (0) target = $region45
    $region44: #{matclassification_net.1} parent=1 // pred_region
      _
    $region45: #{matclassification_net.1} parent=1 // pred_fallthru
      _
    // Predicated region
    $region46: #{matclassification_net.1} parent=1 // pred_check
      _
    $region47: #{matclassification_net.1} parent=1 // pred_check_branch
      %63 = sbr.rel (0) target = $region49
    $region48: #{matclassification_net.1} parent=1 // pred_region
      %64 = dma.done [#allocation4], 2048
    $region49: #{matclassification_net.1} parent=1 // pred_fallthru
      _
    // Predicated region
    $region50: #{matclassification_net.1} parent=1 // pred_check
      _
    $region51: #{matclassification_net.1} parent=1 // pred_check_branch
      %66 = sbr.rel (0) target = $region53
    $region52: #{matclassification_net.1} parent=1 // pred_region
      %67 = dma.done [#allocation6], 8192
    $region53: #{matclassification_net.1} parent=1 // pred_fallthru
      _
    %v69 = vld [vmem:[%s0] sm:$0xff]
    %v70 = vpack.c.bf16 %v69, %v69
    %v71 = vld [vmem:[%s1] sm:$0xf]
    %v72 = vld [vmem:[%s1 + $0x4] sm:$0x1]
    %v73 = vld [vmem:[%s2] sm:$0x1]
    %v75 = vlaneseq
    %v76 = vshrl.u32 %v75, 7
    %v77 = vsub.s32 0, %v76
    %v78 = vrot.slane %v73, %v77
    %v82 = vunpack.c.l.b16 %v71
    %v83 = vunpack.c.l.b16 %v72
    %v84 = vpack.c.b16 %v83, %v82
    %vm85 = vcmask 72704
    %v87 = vsel %vm85, %v70, 0
    %vm89 = vcmask 1043456
    %vm90 = vcmask 1044480
    %v91 = vsel %vm89, 4294967295, 65535
    %v92 = vsel %vm90, %v91, 0
    %v94 = vand.u32 %v84, %v92
    %96 = vmatprep.subr.bf16.mxu0 0
    %97 = vmatpush1.bf16.msra.mxu0 %v94
    %98 = vmatprep.subr.bf16.mxu0 0
    %99 = vmatpush1.bf16.msra.mxu0 0
    %100 = vmatprep.subr.bf16.mxu0 0
    %101 = vmatpush1.bf16.msra.mxu0 0
    %102 = vmatprep.subr.bf16.mxu0 0
    %103 = vmatpush1.bf16.msra.mxu0 0
    %104 = vmatprep.subr.bf16.mxu0 0
    %105 = vmatpush1.bf16.msra.mxu0 0
    %106 = vmatprep.subr.bf16.mxu0 0
    %107 = vmatpush1.bf16.msra.mxu0 0
    %108 = vmatprep.subr.bf16.mxu0 0
    %109 = vmatpush1.bf16.msra.mxu0 0
    %110 = vmatprep.subr.bf16.mxu0 0
    %111 = vmatpush1.bf16.msra.mxu0 0
    %112 = vmatprep.subr.bf16.mxu0 0
    %113 = vmatpush1.bf16.msra.mxu0 0
    %114 = vmatprep.subr.bf16.mxu0 0
    %115 = vmatpush1.bf16.msra.mxu0 0
    %116 = vmatprep.subr.bf16.mxu0 0
    %117 = vmatpush1.bf16.msra.mxu0 0
    %118 = vmatprep.subr.bf16.mxu0 0
    %119 = vmatpush1.bf16.msra.mxu0 0
    %120 = vmatprep.subr.bf16.mxu0 0
    %121 = vmatpush1.bf16.msra.mxu0 0
    %122 = vmatprep.subr.bf16.mxu0 0
    %123 = vmatpush1.bf16.msra.mxu0 0
    %124 = vmatprep.subr.bf16.mxu0 0
    %125 = vmatpush1.bf16.msra.mxu0 0
    %126 = vmatprep.subr.bf16.mxu0 0
    %127 = vmatpush1.bf16.msra.mxu0 0
    %128 = vmatprep.mubr.bf16.mxu0 0
    %129 = vmatmul.mubr.bf16.gmra.mrb[0].mxu0 %v87
    %v130 = vpop.f32.mrb[0].mxu0
    %v131 = vadd.f32 %v78, %v130
    %v132 = vpop.f32.mrb[0].mxu0
    %v133 = vpop.f32.mrb[0].mxu0
    %v134 = vpop.f32.mrb[0].mxu0
    %135 = vdwg.mxu0
    %v136 = vmul.f32 %v131, 0.01
    %v137 = vmax.f32 %v131, %v136
    %v138 = vpack.c.bf16 %v137, %v137
    %v139 = vld [vmem:[%s3] sm:$0xf]
    %v140 = vld [vmem:[%s3 + $0x4] sm:$0xf]
    %v141 = vld [vmem:[%s3 + $0x8] sm:$0xf]
    %v142 = vld [vmem:[%s3 + $0xc] sm:$0xf]
    %v143 = vld [vmem:[%s3 + $0x10] sm:$0xf]
    %v144 = vld [vmem:[%s3 + $0x14] sm:$0xf]
    %v145 = vld [vmem:[%s3 + $0x18] sm:$0xf]
    %v146 = vld [vmem:[%s3 + $0x1c] sm:$0xf]
    %v147 = vld [vmem:[%s4] sm:$0x1]
    %v149 = vlaneseq
    %v150 = vshrl.u32 %v149, 7
    %v151 = vsub.s32 0, %v150
    %v152 = vrot.slane %v147, %v151
    %v162 = vunpack.c.l.b16 %v139
    %v163 = vunpack.c.l.b16 %v140
    %v164 = vunpack.c.l.b16 %v141
    %v165 = vunpack.c.l.b16 %v142
    %v166 = vunpack.c.l.b16 %v143
    %v167 = vunpack.c.l.b16 %v144
    %v168 = vunpack.c.l.b16 %v145
    %v169 = vunpack.c.l.b16 %v146
    %v170 = vpack.c.b16 %v163, %v162
    %v171 = vpack.c.b16 %v165, %v164
    %v172 = vpack.c.b16 %v167, %v166
    %v173 = vpack.c.b16 %v169, %v168
    %vm178 = vcmask 523264
    %v180 = vsel %vm178, %v138, 0
    %182 = vmatprep.subr.bf16.mxu0 0
    %183 = vmatpush1.bf16.msra.mxu0 %v170
    %184 = vmatprep.subr.bf16.mxu0 0
    %185 = vmatpush1.bf16.msra.mxu0 %v171
    %186 = vmatprep.subr.bf16.mxu0 0
    %187 = vmatpush1.bf16.msra.mxu0 %v172
    %188 = vmatprep.subr.bf16.mxu0 0
    %189 = vmatpush1.bf16.msra.mxu0 %v173
    %190 = vmatprep.subr.bf16.mxu0 0
    %191 = vmatpush1.bf16.msra.mxu0 0
    %192 = vmatprep.subr.bf16.mxu0 0
    %193 = vmatpush1.bf16.msra.mxu0 0
    %194 = vmatprep.subr.bf16.mxu0 0
    %195 = vmatpush1.bf16.msra.mxu0 0
    %196 = vmatprep.subr.bf16.mxu0 0
    %197 = vmatpush1.bf16.msra.mxu0 0
    %198 = vmatprep.subr.bf16.mxu0 0
    %199 = vmatpush1.bf16.msra.mxu0 0
    %200 = vmatprep.subr.bf16.mxu0 0
    %201 = vmatpush1.bf16.msra.mxu0 0
    %202 = vmatprep.subr.bf16.mxu0 0
    %203 = vmatpush1.bf16.msra.mxu0 0
    %204 = vmatprep.subr.bf16.mxu0 0
    %205 = vmatpush1.bf16.msra.mxu0 0
    %206 = vmatprep.subr.bf16.mxu0 0
    %207 = vmatpush1.bf16.msra.mxu0 0
    %208 = vmatprep.subr.bf16.mxu0 0
    %209 = vmatpush1.bf16.msra.mxu0 0
    %210 = vmatprep.subr.bf16.mxu0 0
    %211 = vmatpush1.bf16.msra.mxu0 0
    %212 = vmatprep.subr.bf16.mxu0 0
    %213 = vmatpush1.bf16.msra.mxu0 0
    %214 = vmatprep.mubr.bf16.mxu0 0
    %215 = vmatmul.mubr.bf16.gmra.mrb[0].mxu0 %v180
    %v216 = vpop.f32.mrb[0].mxu0
    %v217 = vadd.f32 %v152, %v216
    %v218 = vpop.f32.mrb[0].mxu0
    %v219 = vpop.f32.mrb[0].mxu0
    %v220 = vpop.f32.mrb[0].mxu0
    %221 = vdwg.mxu0
    %v222 = vmul.f32 %v217, 0.2
    %v223 = vmax.f32 %v217, %v222
    %v224 = vpack.c.bf16 %v223, %v223
    %v225 = vld [vmem:[#allocation3] sm:$0xff]
    %v226 = vld [vmem:[#allocation3 + $0x8] sm:$0xff]
    %v227 = vld [vmem:[#allocation3 + $0x10] sm:$0xff]
    %v228 = vld [vmem:[#allocation3 + $0x18] sm:$0xff]
    %v229 = vld [vmem:[#allocation3 + $0x20] sm:$0xff]
    %v230 = vld [vmem:[#allocation3 + $0x28] sm:$0xff]
    %v231 = vld [vmem:[#allocation3 + $0x30] sm:$0xff]
    %v232 = vld [vmem:[#allocation3 + $0x38] sm:$0xff]
    %v233 = vld [vmem:[#allocation3 + $0x40] sm:$0xff]
    %v234 = vld [vmem:[#allocation3 + $0x48] sm:$0xff]
    %v235 = vld [vmem:[#allocation3 + $0x50] sm:$0xff]
    %v236 = vld [vmem:[#allocation3 + $0x58] sm:$0xff]
    %v237 = vld [vmem:[#allocation3 + $0x60] sm:$0xff]
    %v238 = vld [vmem:[#allocation3 + $0x68] sm:$0xff]
    %v239 = vld [vmem:[#allocation3 + $0x70] sm:$0xff]
    %v240 = vld [vmem:[#allocation3 + $0x78] sm:$0xff]
    %v241 = vld [vmem:[%s6] sm:$0x3]
    %v243 = vlaneseq
    %v244 = vshrl.u32 %v243, 7
    %v245 = vsub.s32 0, %v244
    %v246 = vrot.slane %v241, %v245
    %v247 = vlaneseq
    %v248 = vshrl.u32 %v247, 7
    %v249 = vsub.s32 1, %v248
    %v250 = vrot.slane %v241, %v249
    %v269 = vunpack.c.l.b16 %v225
    %v270 = vunpack.c.h.b16 %v225
    %v271 = vunpack.c.l.b16 %v226
    %v272 = vunpack.c.h.b16 %v226
    %v273 = vunpack.c.l.b16 %v227
    %v274 = vunpack.c.h.b16 %v227
    %v275 = vunpack.c.l.b16 %v228
    %v276 = vunpack.c.h.b16 %v228
    %v277 = vunpack.c.l.b16 %v229
    %v278 = vunpack.c.h.b16 %v229
    %v279 = vunpack.c.l.b16 %v230
    %v280 = vunpack.c.h.b16 %v230
    %v281 = vunpack.c.l.b16 %v231
    %v282 = vunpack.c.h.b16 %v231
    %v283 = vunpack.c.l.b16 %v232
    %v284 = vunpack.c.h.b16 %v232
    %v285 = vunpack.c.l.b16 %v233
    %v286 = vunpack.c.h.b16 %v233
    %v287 = vunpack.c.l.b16 %v234
    %v288 = vunpack.c.h.b16 %v234
    %v289 = vunpack.c.l.b16 %v235
    %v290 = vunpack.c.h.b16 %v235
    %v291 = vunpack.c.l.b16 %v236
    %v292 = vunpack.c.h.b16 %v236
    %v293 = vunpack.c.l.b16 %v237
    %v294 = vunpack.c.h.b16 %v237
    %v295 = vunpack.c.l.b16 %v238
    %v296 = vunpack.c.h.b16 %v238
    %v297 = vunpack.c.l.b16 %v239
    %v298 = vunpack.c.h.b16 %v239
    %v299 = vunpack.c.l.b16 %v240
    %v300 = vunpack.c.h.b16 %v240
    %v301 = vpack.c.b16 %v271, %v269
    %v302 = vpack.c.b16 %v272, %v270
    %v303 = vpack.c.b16 %v275, %v273
    %v304 = vpack.c.b16 %v276, %v274
    %v305 = vpack.c.b16 %v279, %v277
    %v306 = vpack.c.b16 %v280, %v278
    %v307 = vpack.c.b16 %v283, %v281
    %v308 = vpack.c.b16 %v284, %v282
    %v309 = vpack.c.b16 %v287, %v285
    %v310 = vpack.c.b16 %v288, %v286
    %v311 = vpack.c.b16 %v291, %v289
    %v312 = vpack.c.b16 %v292, %v290
    %v313 = vpack.c.b16 %v295, %v293
    %v314 = vpack.c.b16 %v296, %v294
    %v315 = vpack.c.b16 %v299, %v297
    %v316 = vpack.c.b16 %v300, %v298
    %333 = vmatprep.subr.bf16.mxu0 %v302
    %334 = vmatpush1.bf16.msra.mxu0 %v301
    %335 = vmatprep.subr.bf16.mxu0 %v304
    %336 = vmatpush1.bf16.msra.mxu0 %v303
    %337 = vmatprep.subr.bf16.mxu0 %v306
    %338 = vmatpush1.bf16.msra.mxu0 %v305
    %339 = vmatprep.subr.bf16.mxu0 %v308
    %340 = vmatpush1.bf16.msra.mxu0 %v307
    %341 = vmatprep.subr.bf16.mxu0 %v310
    %342 = vmatpush1.bf16.msra.mxu0 %v309
    %343 = vmatprep.subr.bf16.mxu0 %v312
    %344 = vmatpush1.bf16.msra.mxu0 %v311
    %345 = vmatprep.subr.bf16.mxu0 %v314
    %346 = vmatpush1.bf16.msra.mxu0 %v313
    %347 = vmatprep.subr.bf16.mxu0 %v316
    %348 = vmatpush1.bf16.msra.mxu0 %v315
    %349 = vmatprep.subr.bf16.mxu0 0
    %350 = vmatpush1.bf16.msra.mxu0 0
    %351 = vmatprep.subr.bf16.mxu0 0
    %352 = vmatpush1.bf16.msra.mxu0 0
    %353 = vmatprep.subr.bf16.mxu0 0
    %354 = vmatpush1.bf16.msra.mxu0 0
    %355 = vmatprep.subr.bf16.mxu0 0
    %356 = vmatpush1.bf16.msra.mxu0 0
    %357 = vmatprep.subr.bf16.mxu0 0
    %358 = vmatpush1.bf16.msra.mxu0 0
    %359 = vmatprep.subr.bf16.mxu0 0
    %360 = vmatpush1.bf16.msra.mxu0 0
    %361 = vmatprep.subr.bf16.mxu0 0
    %362 = vmatpush1.bf16.msra.mxu0 0
    %363 = vmatprep.subr.bf16.mxu0 0
    %364 = vmatpush1.bf16.msra.mxu0 0
    %365 = vmatprep.mubr.bf16.mxu0 0
    %366 = vmatmul.mubr.bf16.gmra.mrb[0].mxu0 %v224
    %v367 = vpop.f32.mrb[0].mxu0
    %v368 = vadd.f32 %v246, %v367
    %v369 = vpop.f32.mrb[0].mxu0
    %v370 = vadd.f32 %v250, %v369
    %v371 = vpop.f32.mrb[0].mxu0
    %v372 = vpop.f32.mrb[0].mxu0
    %373 = vdwg.mxu0
    %v374 = vmul.f32 %v368, 0.2
    %v375 = vmul.f32 %v370, 0.2
    %v376 = vmax.f32 %v368, %v374
    %v377 = vmax.f32 %v370, %v375
    %v378 = vpack.c.bf16 %v376, %v376
    %v379 = vpack.c.bf16 %v377, %v377
    %v380 = vld [vmem:[#allocation5] sm:$0xff]
    %v381 = vld [vmem:[#allocation5 + $0x8] sm:$0xff]
    %v382 = vld [vmem:[#allocation5 + $0x10] sm:$0xff]
    %v383 = vld [vmem:[#allocation5 + $0x18] sm:$0xff]
    %v384 = vld [vmem:[#allocation5 + $0x20] sm:$0xff]
    %v385 = vld [vmem:[#allocation5 + $0x28] sm:$0xff]
    %v386 = vld [vmem:[#allocation5 + $0x30] sm:$0xff]
    %v387 = vld [vmem:[#allocation5 + $0x38] sm:$0xff]
    %v388 = vld [vmem:[#allocation5 + $0x40] sm:$0xff]
    %v389 = vld [vmem:[#allocation5 + $0x48] sm:$0xff]
    %v390 = vld [vmem:[#allocation5 + $0x50] sm:$0xff]
    %v391 = vld [vmem:[#allocation5 + $0x58] sm:$0xff]
    %v392 = vld [vmem:[#allocation5 + $0x60] sm:$0xff]
    %v393 = vld [vmem:[#allocation5 + $0x68] sm:$0xff]
    %v394 = vld [vmem:[#allocation5 + $0x70] sm:$0xff]
    %v395 = vld [vmem:[#allocation5 + $0x78] sm:$0xff]
    %v396 = vld [vmem:[#allocation5 + $0x80] sm:$0xff]
    %v397 = vld [vmem:[#allocation5 + $0x88] sm:$0xff]
    %v398 = vld [vmem:[#allocation5 + $0x90] sm:$0xff]
    %v399 = vld [vmem:[#allocation5 + $0x98] sm:$0xff]
    %v400 = vld [vmem:[#allocation5 + $0xa0] sm:$0xff]
    %v401 = vld [vmem:[#allocation5 + $0xa8] sm:$0xff]
    %v402 = vld [vmem:[#allocation5 + $0xb0] sm:$0xff]
    %v403 = vld [vmem:[#allocation5 + $0xb8] sm:$0xff]
    %v404 = vld [vmem:[#allocation5 + $0xc0] sm:$0xff]
    %v405 = vld [vmem:[#allocation5 + $0xc8] sm:$0xff]
    %v406 = vld [vmem:[#allocation5 + $0xd0] sm:$0xff]
    %v407 = vld [vmem:[#allocation5 + $0xd8] sm:$0xff]
    %v408 = vld [vmem:[#allocation5 + $0xe0] sm:$0xff]
    %v409 = vld [vmem:[#allocation5 + $0xe8] sm:$0xff]
    %v410 = vld [vmem:[#allocation5 + $0xf0] sm:$0xff]
    %v411 = vld [vmem:[#allocation5 + $0xf8] sm:$0xff]
    %v412 = vld [vmem:[#allocation5 + $0x100] sm:$0xff]
    %v413 = vld [vmem:[#allocation5 + $0x108] sm:$0xff]
    %v414 = vld [vmem:[#allocation5 + $0x110] sm:$0xff]
    %v415 = vld [vmem:[#allocation5 + $0x118] sm:$0xff]
    %v416 = vld [vmem:[#allocation5 + $0x120] sm:$0xff]
    %v417 = vld [vmem:[#allocation5 + $0x128] sm:$0xff]
    %v418 = vld [vmem:[#allocation5 + $0x130] sm:$0xff]
    %v419 = vld [vmem:[#allocation5 + $0x138] sm:$0xff]
    %v420 = vld [vmem:[#allocation5 + $0x140] sm:$0xff]
    %v421 = vld [vmem:[#allocation5 + $0x148] sm:$0xff]
    %v422 = vld [vmem:[#allocation5 + $0x150] sm:$0xff]
    %v423 = vld [vmem:[#allocation5 + $0x158] sm:$0xff]
    %v424 = vld [vmem:[#allocation5 + $0x160] sm:$0xff]
    %v425 = vld [vmem:[#allocation5 + $0x168] sm:$0xff]
    %v426 = vld [vmem:[#allocation5 + $0x170] sm:$0xff]
    %v427 = vld [vmem:[#allocation5 + $0x178] sm:$0xff]
    %v428 = vld [vmem:[#allocation5 + $0x180] sm:$0xff]
    %v429 = vld [vmem:[#allocation5 + $0x188] sm:$0xff]
    %v430 = vld [vmem:[#allocation5 + $0x190] sm:$0xff]
    %v431 = vld [vmem:[#allocation5 + $0x198] sm:$0xff]
    %v432 = vld [vmem:[#allocation5 + $0x1a0] sm:$0xff]
    %v433 = vld [vmem:[#allocation5 + $0x1a8] sm:$0xff]
    %v434 = vld [vmem:[#allocation5 + $0x1b0] sm:$0xff]
    %v435 = vld [vmem:[#allocation5 + $0x1b8] sm:$0xff]
    %v436 = vld [vmem:[#allocation5 + $0x1c0] sm:$0xff]
    %v437 = vld [vmem:[#allocation5 + $0x1c8] sm:$0xff]
    %v438 = vld [vmem:[#allocation5 + $0x1d0] sm:$0xff]
    %v439 = vld [vmem:[#allocation5 + $0x1d8] sm:$0xff]
    %v440 = vld [vmem:[#allocation5 + $0x1e0] sm:$0xff]
    %v441 = vld [vmem:[#allocation5 + $0x1e8] sm:$0xff]
    %v442 = vld [vmem:[#allocation5 + $0x1f0] sm:$0xff]
    %v443 = vld [vmem:[#allocation5 + $0x1f8] sm:$0xff]
    %v444 = vld [vmem:[%s8] sm:$0xf]
    %v446 = vlaneseq
    %v447 = vshrl.u32 %v446, 7
    %v448 = vsub.s32 0, %v447
    %v449 = vrot.slane %v444, %v448
    %v450 = vlaneseq
    %v451 = vshrl.u32 %v450, 7
    %v452 = vsub.s32 1, %v451
    %v453 = vrot.slane %v444, %v452
    %v454 = vlaneseq
    %v455 = vshrl.u32 %v454, 7
    %v456 = vsub.s32 2, %v455
    %v457 = vrot.slane %v444, %v456
    %v458 = vlaneseq
    %v459 = vshrl.u32 %v458, 7
    %v460 = vsub.s32 3, %v459
    %v461 = vrot.slane %v444, %v460
    %v530 = vunpack.c.l.b16 %v380
    %v531 = vunpack.c.h.b16 %v380
    %v532 = vunpack.c.l.b16 %v381
    %v533 = vunpack.c.h.b16 %v381
    %v534 = vunpack.c.l.b16 %v382
    %v535 = vunpack.c.h.b16 %v382
    %v536 = vunpack.c.l.b16 %v383
    %v537 = vunpack.c.h.b16 %v383
    %v538 = vunpack.c.l.b16 %v384
    %v539 = vunpack.c.h.b16 %v384
    %v540 = vunpack.c.l.b16 %v385
    %v541 = vunpack.c.h.b16 %v385
    %v542 = vunpack.c.l.b16 %v386
    %v543 = vunpack.c.h.b16 %v386
    %v544 = vunpack.c.l.b16 %v387
    %v545 = vunpack.c.h.b16 %v387
    %v546 = vunpack.c.l.b16 %v388
    %v547 = vunpack.c.h.b16 %v388
    %v548 = vunpack.c.l.b16 %v389
    %v549 = vunpack.c.h.b16 %v389
    %v550 = vunpack.c.l.b16 %v390
    %v551 = vunpack.c.h.b16 %v390
    %v552 = vunpack.c.l.b16 %v391
    %v553 = vunpack.c.h.b16 %v391
    %v554 = vunpack.c.l.b16 %v392
    %v555 = vunpack.c.h.b16 %v392
    %v556 = vunpack.c.l.b16 %v393
    %v557 = vunpack.c.h.b16 %v393
    %v558 = vunpack.c.l.b16 %v394
    %v559 = vunpack.c.h.b16 %v394
    %v560 = vunpack.c.l.b16 %v395
    %v561 = vunpack.c.h.b16 %v395
    %v562 = vunpack.c.l.b16 %v396
    %v563 = vunpack.c.h.b16 %v396
    %v564 = vunpack.c.l.b16 %v397
    %v565 = vunpack.c.h.b16 %v397
    %v566 = vunpack.c.l.b16 %v398
    %v567 = vunpack.c.h.b16 %v398
    %v568 = vunpack.c.l.b16 %v399
    %v569 = vunpack.c.h.b16 %v399
    %v570 = vunpack.c.l.b16 %v400
    %v571 = vunpack.c.h.b16 %v400
    %v572 = vunpack.c.l.b16 %v401
    %v573 = vunpack.c.h.b16 %v401
    %v574 = vunpack.c.l.b16 %v402
    %v575 = vunpack.c.h.b16 %v402
    %v576 = vunpack.c.l.b16 %v403
    %v577 = vunpack.c.h.b16 %v403
    %v578 = vunpack.c.l.b16 %v404
    %v579 = vunpack.c.h.b16 %v404
    %v580 = vunpack.c.l.b16 %v405
    %v581 = vunpack.c.h.b16 %v405
    %v582 = vunpack.c.l.b16 %v406
    %v583 = vunpack.c.h.b16 %v406
    %v584 = vunpack.c.l.b16 %v407
    %v585 = vunpack.c.h.b16 %v407
    %v586 = vunpack.c.l.b16 %v408
    %v587 = vunpack.c.h.b16 %v408
    %v588 = vunpack.c.l.b16 %v409
    %v589 = vunpack.c.h.b16 %v409
    %v590 = vunpack.c.l.b16 %v410
    %v591 = vunpack.c.h.b16 %v410
    %v592 = vunpack.c.l.b16 %v411
    %v593 = vunpack.c.h.b16 %v411
    %v594 = vunpack.c.l.b16 %v412
    %v595 = vunpack.c.h.b16 %v412
    %v596 = vunpack.c.l.b16 %v413
    %v597 = vunpack.c.h.b16 %v413
    %v598 = vunpack.c.l.b16 %v414
    %v599 = vunpack.c.h.b16 %v414
    %v600 = vunpack.c.l.b16 %v415
    %v601 = vunpack.c.h.b16 %v415
    %v602 = vunpack.c.l.b16 %v416
    %v603 = vunpack.c.h.b16 %v416
    %v604 = vunpack.c.l.b16 %v417
    %v605 = vunpack.c.h.b16 %v417
    %v606 = vunpack.c.l.b16 %v418
    %v607 = vunpack.c.h.b16 %v418
    %v608 = vunpack.c.l.b16 %v419
    %v609 = vunpack.c.h.b16 %v419
    %v610 = vunpack.c.l.b16 %v420
    %v611 = vunpack.c.h.b16 %v420
    %v612 = vunpack.c.l.b16 %v421
    %v613 = vunpack.c.h.b16 %v421
    %v614 = vunpack.c.l.b16 %v422
    %v615 = vunpack.c.h.b16 %v422
    %v616 = vunpack.c.l.b16 %v423
    %v617 = vunpack.c.h.b16 %v423
    %v618 = vunpack.c.l.b16 %v424
    %v619 = vunpack.c.h.b16 %v424
    %v620 = vunpack.c.l.b16 %v425
    %v621 = vunpack.c.h.b16 %v425
    %v622 = vunpack.c.l.b16 %v426
    %v623 = vunpack.c.h.b16 %v426
    %v624 = vunpack.c.l.b16 %v427
    %v625 = vunpack.c.h.b16 %v427
    %v626 = vunpack.c.l.b16 %v428
    %v627 = vunpack.c.h.b16 %v428
    %v628 = vunpack.c.l.b16 %v429
    %v629 = vunpack.c.h.b16 %v429
    %v630 = vunpack.c.l.b16 %v430
    %v631 = vunpack.c.h.b16 %v430
    %v632 = vunpack.c.l.b16 %v431
    %v633 = vunpack.c.h.b16 %v431
    %v634 = vunpack.c.l.b16 %v432
    %v635 = vunpack.c.h.b16 %v432
    %v636 = vunpack.c.l.b16 %v433
    %v637 = vunpack.c.h.b16 %v433
    %v638 = vunpack.c.l.b16 %v434
    %v639 = vunpack.c.h.b16 %v434
    %v640 = vunpack.c.l.b16 %v435
    %v641 = vunpack.c.h.b16 %v435
    %v642 = vunpack.c.l.b16 %v436
    %v643 = vunpack.c.h.b16 %v436
    %v644 = vunpack.c.l.b16 %v437
    %v645 = vunpack.c.h.b16 %v437
    %v646 = vunpack.c.l.b16 %v438
    %v647 = vunpack.c.h.b16 %v438
    %v648 = vunpack.c.l.b16 %v439
    %v649 = vunpack.c.h.b16 %v439
    %v650 = vunpack.c.l.b16 %v440
    %v651 = vunpack.c.h.b16 %v440
    %v652 = vunpack.c.l.b16 %v441
    %v653 = vunpack.c.h.b16 %v441
    %v654 = vunpack.c.l.b16 %v442
    %v655 = vunpack.c.h.b16 %v442
    %v656 = vunpack.c.l.b16 %v443
    %v657 = vunpack.c.h.b16 %v443
    %v658 = vpack.c.b16 %v534, %v530
    %v659 = vpack.c.b16 %v535, %v531
    %v660 = vpack.c.b16 %v536, %v532
    %v661 = vpack.c.b16 %v537, %v533
    %v662 = vpack.c.b16 %v542, %v538
    %v663 = vpack.c.b16 %v543, %v539
    %v664 = vpack.c.b16 %v544, %v540
    %v665 = vpack.c.b16 %v545, %v541
    %v666 = vpack.c.b16 %v550, %v546
    %v667 = vpack.c.b16 %v551, %v547
    %v668 = vpack.c.b16 %v552, %v548
    %v669 = vpack.c.b16 %v553, %v549
    %v670 = vpack.c.b16 %v558, %v554
    %v671 = vpack.c.b16 %v559, %v555
    %v672 = vpack.c.b16 %v560, %v556
    %v673 = vpack.c.b16 %v561, %v557
    %v674 = vpack.c.b16 %v566, %v562
    %v675 = vpack.c.b16 %v567, %v563
    %v676 = vpack.c.b16 %v568, %v564
    %v677 = vpack.c.b16 %v569, %v565
    %v678 = vpack.c.b16 %v574, %v570
    %v679 = vpack.c.b16 %v575, %v571
    %v680 = vpack.c.b16 %v576, %v572
    %v681 = vpack.c.b16 %v577, %v573
    %v682 = vpack.c.b16 %v582, %v578
    %v683 = vpack.c.b16 %v583, %v579
    %v684 = vpack.c.b16 %v584, %v580
    %v685 = vpack.c.b16 %v585, %v581
    %v686 = vpack.c.b16 %v590, %v586
    %v687 = vpack.c.b16 %v591, %v587
    %v688 = vpack.c.b16 %v592, %v588
    %v689 = vpack.c.b16 %v593, %v589
    %v690 = vpack.c.b16 %v598, %v594
    %v691 = vpack.c.b16 %v599, %v595
    %v692 = vpack.c.b16 %v600, %v596
    %v693 = vpack.c.b16 %v601, %v597
    %v694 = vpack.c.b16 %v606, %v602
    %v695 = vpack.c.b16 %v607, %v603
    %v696 = vpack.c.b16 %v608, %v604
    %v697 = vpack.c.b16 %v609, %v605
    %v698 = vpack.c.b16 %v614, %v610
    %v699 = vpack.c.b16 %v615, %v611
    %v700 = vpack.c.b16 %v616, %v612
    %v701 = vpack.c.b16 %v617, %v613
    %v702 = vpack.c.b16 %v622, %v618
    %v703 = vpack.c.b16 %v623, %v619
    %v704 = vpack.c.b16 %v624, %v620
    %v705 = vpack.c.b16 %v625, %v621
    %v706 = vpack.c.b16 %v630, %v626
    %v707 = vpack.c.b16 %v631, %v627
    %v708 = vpack.c.b16 %v632, %v628
    %v709 = vpack.c.b16 %v633, %v629
    %v710 = vpack.c.b16 %v638, %v634
    %v711 = vpack.c.b16 %v639, %v635
    %v712 = vpack.c.b16 %v640, %v636
    %v713 = vpack.c.b16 %v641, %v637
    %v714 = vpack.c.b16 %v646, %v642
    %v715 = vpack.c.b16 %v647, %v643
    %v716 = vpack.c.b16 %v648, %v644
    %v717 = vpack.c.b16 %v649, %v645
    %v718 = vpack.c.b16 %v654, %v650
    %v719 = vpack.c.b16 %v655, %v651
    %v720 = vpack.c.b16 %v656, %v652
    %v721 = vpack.c.b16 %v657, %v653
    %786 = vmatprep.subr.bf16.mxu0 %v659
    %787 = vmatpush1.bf16.msra.mxu0 %v658
    %788 = vmatprep.subr.bf16.mxu0 %v663
    %789 = vmatpush1.bf16.msra.mxu0 %v662
    %790 = vmatprep.subr.bf16.mxu0 %v667
    %791 = vmatpush1.bf16.msra.mxu0 %v666
    %792 = vmatprep.subr.bf16.mxu0 %v671
    %793 = vmatpush1.bf16.msra.mxu0 %v670
    %794 = vmatprep.subr.bf16.mxu0 %v675
    %795 = vmatpush1.bf16.msra.mxu0 %v674
    %796 = vmatprep.subr.bf16.mxu0 %v679
    %797 = vmatpush1.bf16.msra.mxu0 %v678
    %798 = vmatprep.subr.bf16.mxu0 %v683
    %799 = vmatpush1.bf16.msra.mxu0 %v682
    %800 = vmatprep.subr.bf16.mxu0 %v687
    %801 = vmatpush1.bf16.msra.mxu0 %v686
    %802 = vmatprep.subr.bf16.mxu0 %v691
    %803 = vmatpush1.bf16.msra.mxu0 %v690
    %804 = vmatprep.subr.bf16.mxu0 %v695
    %805 = vmatpush1.bf16.msra.mxu0 %v694
    %806 = vmatprep.subr.bf16.mxu0 %v699
    %807 = vmatpush1.bf16.msra.mxu0 %v698
    %808 = vmatprep.subr.bf16.mxu0 %v703
    %809 = vmatpush1.bf16.msra.mxu0 %v702
    %810 = vmatprep.subr.bf16.mxu0 %v707
    %811 = vmatpush1.bf16.msra.mxu0 %v706
    %812 = vmatprep.subr.bf16.mxu0 %v711
    %813 = vmatpush1.bf16.msra.mxu0 %v710
    %814 = vmatprep.subr.bf16.mxu0 %v715
    %815 = vmatpush1.bf16.msra.mxu0 %v714
    %816 = vmatprep.subr.bf16.mxu0 %v719
    %817 = vmatpush1.bf16.msra.mxu0 %v718
    %818 = vmatprep.mubr.bf16.mxu0 %v379
    %819 = vmatmul.mubr.bf16.gmra.mrb[0].mxu0 %v378
    %v820 = vpop.f32.mrb[0].mxu0
    %v821 = vadd.f32 %v449, %v820
    %v822 = vpop.f32.mrb[0].mxu0
    %v823 = vadd.f32 %v453, %v822
    %v824 = vpop.f32.mrb[0].mxu0
    %v825 = vpop.f32.mrb[0].mxu0
    %826 = vdwg.mxu0
    %827 = vmatprep.subr.bf16.mxu0 %v661
    %828 = vmatpush1.bf16.msra.mxu0 %v660
    %829 = vmatprep.subr.bf16.mxu0 %v665
    %830 = vmatpush1.bf16.msra.mxu0 %v664
    %831 = vmatprep.subr.bf16.mxu0 %v669
    %832 = vmatpush1.bf16.msra.mxu0 %v668
    %833 = vmatprep.subr.bf16.mxu0 %v673
    %834 = vmatpush1.bf16.msra.mxu0 %v672
    %835 = vmatprep.subr.bf16.mxu0 %v677
    %836 = vmatpush1.bf16.msra.mxu0 %v676
    %837 = vmatprep.subr.bf16.mxu0 %v681
    %838 = vmatpush1.bf16.msra.mxu0 %v680
    %839 = vmatprep.subr.bf16.mxu0 %v685
    %840 = vmatpush1.bf16.msra.mxu0 %v684
    %841 = vmatprep.subr.bf16.mxu0 %v689
    %842 = vmatpush1.bf16.msra.mxu0 %v688
    %843 = vmatprep.subr.bf16.mxu0 %v693
    %844 = vmatpush1.bf16.msra.mxu0 %v692
    %845 = vmatprep.subr.bf16.mxu0 %v697
    %846 = vmatpush1.bf16.msra.mxu0 %v696
    %847 = vmatprep.subr.bf16.mxu0 %v701
    %848 = vmatpush1.bf16.msra.mxu0 %v700
    %849 = vmatprep.subr.bf16.mxu0 %v705
    %850 = vmatpush1.bf16.msra.mxu0 %v704
    %851 = vmatprep.subr.bf16.mxu0 %v709
    %852 = vmatpush1.bf16.msra.mxu0 %v708
    %853 = vmatprep.subr.bf16.mxu0 %v713
    %854 = vmatpush1.bf16.msra.mxu0 %v712
    %855 = vmatprep.subr.bf16.mxu0 %v717
    %856 = vmatpush1.bf16.msra.mxu0 %v716
    %857 = vmatprep.subr.bf16.mxu0 %v721
    %858 = vmatpush1.bf16.msra.mxu0 %v720
    %859 = vmatprep.mubr.bf16.mxu0 %v379
    %860 = vmatmul.mubr.bf16.gmra.mrb[0].mxu0 %v378
    %v861 = vpop.f32.mrb[0].mxu0
    %v862 = vadd.f32 %v457, %v861
    %v863 = vpop.f32.mrb[0].mxu0
    %v864 = vadd.f32 %v461, %v863
    %v865 = vpop.f32.mrb[0].mxu0
    %v866 = vpop.f32.mrb[0].mxu0
    %867 = vdwg.mxu0
    %v868 = vmul.f32 %v821, 0.01
    %v869 = vmul.f32 %v823, 0.01
    %v870 = vmul.f32 %v862, 0.01
    %v871 = vmul.f32 %v864, 0.01
    %v872 = vmax.f32 %v821, %v868
    %v873 = vmax.f32 %v823, %v869
    %v874 = vmax.f32 %v862, %v870
    %v875 = vmax.f32 %v864, %v871
    %v876 = vpack.c.bf16 %v872, %v872
    %v877 = vpack.c.bf16 %v873, %v873
    %v878 = vpack.c.bf16 %v874, %v874
    %v879 = vpack.c.bf16 %v875, %v875
    %v880 = vld [vmem:[%s9] sm:$0xf]
    %v883 = vunpack.c.l.s4 1966171168
    %v884 = vunpack.c.0.s8 %v883
    %v885 = vlaneseq
    %v886 = vshrl.u32 %v885, 7
    %v887 = vsub.s32 %v884, %v886
    %v888 = vrot.slane %v880, %v887
    %v889 = vcombine.high %v888, %v888
    %v891 = vunpack.c.l.s4 1966171168
    %v892 = vunpack.c.0.s8 %v891
    %v893 = vlaneseq
    %v894 = vshrl.u32 %v893, 7
    %v895 = vsub.s32 %v892, %v894
    %v896 = vrot.slane %v888, %v895
    %v898 = vunpack.c.l.s4 1966171168
    %v899 = vunpack.c.0.s8 %v898
    %v900 = vlaneseq
    %v901 = vshrl.u32 %v900, 7
    %v902 = vsub.s32 %v899, %v901
    %v903 = vrot.slane %v889, %v902
    %v904 = vcombine.high %v896, %v896
    %v905 = vcombine.high %v903, %v903
    %v907 = vpack.i.b16 %v896, %v896
    %v909 = vlaneseq
    %v910 = vshrl.u32 %v909, 7
    %v911 = vsub.s32 0, %v910
    %v912 = vrot.slane %v907, %v911
    %v914 = vpack.i.b16 %v903, %v903
    %v916 = vlaneseq
    %v917 = vshrl.u32 %v916, 7
    %v918 = vsub.s32 0, %v917
    %v919 = vrot.slane %v914, %v918
    %v921 = vpack.i.b16 %v904, %v904
    %v923 = vlaneseq
    %v924 = vshrl.u32 %v923, 7
    %v925 = vsub.s32 0, %v924
    %v926 = vrot.slane %v921, %v925
    %v928 = vpack.i.b16 %v905, %v905
    %v930 = vlaneseq
    %v931 = vshrl.u32 %v930, 7
    %v932 = vsub.s32 0, %v931
    %v933 = vrot.slane %v928, %v932
    %v934 = vmul.bf16 %v876, %v912
    %v935 = vmul.bf16 %v877, %v919
    %v936 = vmul.bf16 %v878, %v926
    %v937 = vmul.bf16 %v879, %v933
    %v938 = vunpack.c.l.bf16 %v934
    %v939 = vunpack.c.l.bf16 %v935
    %v940 = vunpack.c.l.bf16 %v936
    %v941 = vunpack.c.l.bf16 %v937
    %v942 = vadd.f32 %v938, %v939
    %v943 = vadd.f32 %v942, %v940
    %v944 = vadd.f32 %v943, %v941
    %945 = vadd.xlane.f32.xlu0 %v944
    %v946 = vpop.xlane.xlu0 %945
    %v947 = vld [vmem:[#allocation2] sm:$0x1]
    %v949 = vlaneseq
    %v950 = vshrl.u32 %v949, 7
    %v951 = vsub.s32 0, %v950
    %v952 = vrot.slane %v947, %v951
    %v954 = vadd.f32 %v946, %v952
    %v955 = vsub.f32 0.0, %v954
    %v956 = vmul.f32 %v955, 1.442695
    %v957 = vpow.pop %v956
    %v958 = vadd.f32 %v957, 1.0
    %v959 = vrcp.pop %v958
    %v960 = vmul.f32 1.0, %v959
    %vm961 = vcmask 7168
    %962 = vst.msk [vmem:[%s11] sm:$0xff] %vm961, %v960
    // Predicated region
    $region54: #{matclassification_net.1} parent=1 // pred_check
      _
    $region55: #{matclassification_net.1} parent=1 // pred_check_branch
      %964 = sbr.rel (0) target = $region57
    $region56: #{matclassification_net.1} parent=1 // pred_region
      _
    $region57: #{matclassification_net.1} parent=1 // pred_fallthru
      _
    // Predicated region
    $region58: #{matclassification_net.1} parent=1 // pred_check
      _
    $region59: #{matclassification_net.1} parent=1 // pred_check_branch
      %966 = sbr.rel (0) target = $region61
    $region60: #{matclassification_net.1} parent=1 // pred_region
      _
    $region61: #{matclassification_net.1} parent=1 // pred_fallthru
      _
    %967 = vsyncpa [#allocation4], 1
    %968 = vsyncpa [#allocation6], 1

</llo_original>
